<compile_context>
chip_gen: v6e
topology: v6e:2x2x1
jax: 0.10.0
libtpu: 0.0.40
codegen_flags: <defaults>
</compile_context>

<pallas_src>
import math

import jax
import jax.numpy as jnp
from jax import lax
from jax.experimental import pallas as pl
from jax.experimental.pallas import tpu as pltpu


def tape_kernel(x_ref, time_ref, mask_ref, div_ref, phase_ref, o_ref):
    # x_ref:     (Bt, N, D)
    # time_ref:  (Bt, N, 1)
    # mask_ref:  (Bt, N, 1)
    # div_ref:   (1, 1, D)   grid-invariant constant (VMEM resident)
    # phase_ref: (1, 1, D)   grid-invariant constant (VMEM resident)
    bt, n, _ = x_ref.shape

    t = time_ref[...]  # (bt, n, 1) f32
    m = mask_ref[...]  # (bt, n, 1) f32

    row = lax.broadcasted_iota(jnp.int32, (bt, n, 1), 1)

    # interval[k] = time[k] - time[k-1] ; interval[0] = 0 ; zero padded positions
    t_prev = pltpu.roll(t, shift=1, axis=1)           # t_prev[k] = t[k-1] (k>=1)
    interval = jnp.where(row == 0, 0.0, t - t_prev)
    interval = jnp.where(m == 0.0, 0.0, interval)

    sum_interval = jnp.sum(interval, axis=1, keepdims=True)          # (bt, 1, 1)
    sum_interval = jnp.where(sum_interval == 0.0, 1.0, sum_interval)
    num_interval = jnp.sum(m, axis=1, keepdims=True) - 1.0           # (bt, 1, 1)
    num_interval = jnp.where(num_interval == 0.0, 1.0, num_interval)
    avg_interval = sum_interval / num_interval
    interval = interval / avg_interval                               # (bt, n, 1)

    # pos[0] = 1 ; pos[k] = pos[k-1] + interval[k] + 1
    #   => pos[k] = 1 + k + cumsum(interval)[k]
    # Inclusive prefix sum via Hillis-Steele: log2(N) roll+masked-add steps,
    # no (N,N) matrix, no MXU.
    csum = interval
    shift = 1
    while shift < n:
        rolled = pltpu.roll(csum, shift=shift, axis=1)
        csum = csum + jnp.where(row >= shift, rolled, 0.0)
        shift *= 2

    pos = csum + row.astype(jnp.float32) + 1.0
    pos = jnp.where(m == 0.0, 0.0, pos)                              # (bt, n, 1)

    # tape[b,k,j] = sin(pos[b,k] * div[j] + phase[j])
    #   phase[j] = 0 (even j)  -> sin ;  pi/2 (odd j) -> cos
    angle = pos * div_ref[...] + phase_ref[...]                      # (bt, n, d)
    o_ref[...] = x_ref[...] + jnp.sin(angle).astype(o_ref.dtype)


def _pick_batch_tile(b, n, d, bytes_per_elem=4, budget_bytes=2 << 20):
    """Largest divisor Bt of b with Bt*N*D*bytes <= budget (>=1)."""
    bt = 1
    for cand in range(1, b + 1):
        if b % cand == 0 and cand * n * d * bytes_per_elem <= budget_bytes:
            bt = cand
    return bt


def tape_forward(x, time, data_size):
    """x: (B, N, D) f32, time: (B, N) f32, data_size: (B,) int32 valid lengths."""
    b, n, d = x.shape
    assert d % 2 == 0, "feature dim must be even (sin/cos interleave)"

    # mask construction (replaces fix_length + masked_fill setup) — glue in plain JAX
    mask = (jnp.arange(n)[None, :] < data_size[:, None]).astype(jnp.float32)  # (b, n)
    time3 = time.astype(jnp.float32).reshape(b, n, 1)
    mask3 = mask.reshape(b, n, 1)

    # Precomputed constants, fed once and kept VMEM-resident across the grid:
    #   div[2j] = div[2j+1] = exp(2j * -log(10000)/d)
    #   phase[2j] = 0, phase[2j+1] = pi/2   (cos(x) = sin(x + pi/2))
    half = jnp.exp(
        jnp.arange(0, d, 2, dtype=jnp.float32) * (-math.log(10000.0) / d))
    div3 = jnp.repeat(half, 2).reshape(1, 1, d)
    phase3 = jnp.tile(
        jnp.array([0.0, math.pi / 2.0], dtype=jnp.float32), d // 2).reshape(1, 1, d)

    bt = _pick_batch_tile(b, n, d, bytes_per_elem=x.dtype.itemsize)

    out = pl.pallas_call(
        tape_kernel,
        out_shape=jax.ShapeDtypeStruct((b, n, d), x.dtype),
        grid_spec=pltpu.PrefetchScalarGridSpec(
            num_scalar_prefetch=0,
            grid=(b // bt,),
            in_specs=[
                pl.BlockSpec((bt, n, d), lambda i: (i, 0, 0)),   # x
                pl.BlockSpec((bt, n, 1), lambda i: (i, 0, 0)),   # time
                pl.BlockSpec((bt, n, 1), lambda i: (i, 0, 0)),   # mask
                pl.BlockSpec((1, 1, d), lambda i: (0, 0, 0)),    # div   (resident)
                pl.BlockSpec((1, 1, d), lambda i: (0, 0, 0)),    # phase (resident)
            ],
            out_specs=pl.BlockSpec((bt, n, d), lambda i: (i, 0, 0)),
        ),
        compiler_params=pltpu.CompilerParams(
            dimension_semantics=("parallel",),
            vmem_limit_bytes=32 * 1024 * 1024,
        ),
    )(x, time3, mask3, div3, phase3)

    # nn.Dropout in eval mode is the identity.
    return out


def tape_reference(x, time, data_size):
    """Pure-JAX transcription of the PyTorch forward (eval mode), for checking."""
    b, n, d = x.shape
    mask = (jnp.arange(n)[None, :] < data_size[:, None]).astype(jnp.float32)
    time_ = time.at[:, 1:].set(time[:, :-1])
    interval = time - time_
    interval = jnp.where(mask == 0, 0.0, interval)
    sum_interval = interval.sum(-1, keepdims=True)
    sum_interval = jnp.where(sum_interval == 0, 1.0, sum_interval)
    num_interval = mask.sum(-1, keepdims=True) - 1.0
    num_interval = jnp.where(num_interval == 0, 1.0, num_interval)
    avg_interval = sum_interval / num_interval
    interval = interval / avg_interval
    pos = jnp.cumsum(interval, axis=-1) + jnp.arange(n, dtype=jnp.float32)[None, :] + 1.0
    pos = jnp.where(mask == 0, 0.0, pos)
    div_term = jnp.exp(jnp.arange(0, d, 2, dtype=jnp.float32) * -(math.log(10000.0) / d))
    angle = pos[:, :, None] * div_term[None, None, :]
    tape = jnp.zeros_like(x)
    tape = tape.at[:, :, 0::2].set(jnp.sin(angle))
    tape = tape.at[:, :, 1::2].set(jnp.cos(angle))
    return x + tape


if __name__ == "__main__":
    key = jax.random.PRNGKey(0)
    kx, kt = jax.random.split(key)

    b, n, d = 2, 8, 32
    x = jax.random.normal(kx, (b, n, d), dtype=jnp.float32)
    # strictly increasing timestamps per sequence
    time = jnp.cumsum(jax.random.uniform(kt, (b, n), minval=0.5, maxval=2.0,
                                         dtype=jnp.float32), axis=-1)
    data_size = jnp.array([8, 5], dtype=jnp.int32)  # valid lengths per batch element

    out = tape_forward(x, time, data_size)
    out = jax.block_until_ready(out)

    ref = tape_reference(x, time, data_size)
    assert out.shape == (b, n, d) and out.dtype == x.dtype
    assert jnp.allclose(out, ref, rtol=1e-3, atol=1e-3), float(jnp.max(jnp.abs(out - ref)))

    print("KERNEL_OK")
</pallas_src>

<mosaic_0001>
module attributes {stable_mosaic.version = 11 : i64} {
  func.func @tape_kernel(%arg0: i32, %arg1: memref<2x8x32xf32, #tpu.memory_space<vmem>>, %arg2: memref<2x8x1xf32, #tpu.memory_space<vmem>>, %arg3: memref<2x8x1xf32, #tpu.memory_space<vmem>>, %arg4: memref<1x1x32xf32, #tpu.memory_space<vmem>>, %arg5: memref<1x1x32xf32, #tpu.memory_space<vmem>>, %arg6: memref<2x8x32xf32, #tpu.memory_space<vmem>>) attributes {dimension_semantics = [#tpu.dimension_semantics<parallel>], iteration_bounds = array<i64: 1>, scalar_prefetch = 0 : i64, scratch_operands = 0 : i64, tpu.core_type = #tpu.core_type<tc>, window_params = [{transform_indices = @transform_0, window_bounds = array<i64: 2, 8, 32>}, {transform_indices = @transform_1, window_bounds = array<i64: 2, 8, 1>}, {transform_indices = @transform_2, window_bounds = array<i64: 2, 8, 1>}, {pipeline_mode = #tpu.pipeline_mode<synchronous>, transform_indices = @transform_3, window_bounds = array<i64: 1, 1, 32>}, {pipeline_mode = #tpu.pipeline_mode<synchronous>, transform_indices = @transform_4, window_bounds = array<i64: 1, 1, 32>}, {transform_indices = @transform_5, window_bounds = array<i64: 2, 8, 32>}]} {
    %c0 = arith.constant 0 : index
    %c0_0 = arith.constant 0 : index
    %c0_1 = arith.constant 0 : index
    %0 = vector.load %arg2[%c0, %c0_0, %c0_1] : memref<2x8x1xf32, #tpu.memory_space<vmem>>, vector<2x8x1xf32>
    %c0_2 = arith.constant 0 : index
    %c0_3 = arith.constant 0 : index
    %c0_4 = arith.constant 0 : index
    %1 = vector.load %arg3[%c0_2, %c0_3, %c0_4] : memref<2x8x1xf32, #tpu.memory_space<vmem>>, vector<2x8x1xf32>
    %2 = tpu.iota {dimensions = array<i32: 1>} : vector<2x8x1xi32>
    %c1_i32 = arith.constant 1 : i32
    %3 = tpu.dynamic_rotate %0 by %c1_i32 dim 1 : vector<2x8x1xf32>, i32 -> vector<2x8x1xf32>
    %c0_i32 = arith.constant 0 : i32
    %4 = vector.broadcast %c0_i32 : i32 to vector<2x8x1xi32>
    %5 = arith.cmpi eq, %2, %4 : vector<2x8x1xi32>
    %6 = arith.subf %0, %3 : vector<2x8x1xf32>
    %cst = arith.constant 0.000000e+00 : f32
    %7 = vector.broadcast %cst : f32 to vector<2x8x1xf32>
    %8 = arith.select %5, %7, %6 : vector<2x8x1xi1>, vector<2x8x1xf32>
    %cst_5 = arith.constant 0.000000e+00 : f32
    %9 = vector.broadcast %cst_5 : f32 to vector<2x8x1xf32>
    %10 = arith.cmpf oeq, %1, %9 : vector<2x8x1xf32>
    %cst_6 = arith.constant 0.000000e+00 : f32
    %11 = vector.broadcast %cst_6 : f32 to vector<2x8x1xf32>
    %12 = arith.select %10, %11, %8 : vector<2x8x1xi1>, vector<2x8x1xf32>
    %cst_7 = arith.constant dense<0.000000e+00> : vector<2x1xf32>
    %13 = vector.multi_reduction <add>, %12, %cst_7 [1] : vector<2x8x1xf32> to vector<2x1xf32>
    %14 = vector.shape_cast %13 : vector<2x1xf32> to vector<2x1x1xf32>
    %cst_8 = arith.constant 0.000000e+00 : f32
    %15 = vector.broadcast %cst_8 : f32 to vector<2x1x1xf32>
    %16 = arith.cmpf oeq, %14, %15 : vector<2x1x1xf32>
    %cst_9 = arith.constant 1.000000e+00 : f32
    %17 = vector.broadcast %cst_9 : f32 to vector<2x1x1xf32>
    %18 = arith.select %16, %17, %14 : vector<2x1x1xi1>, vector<2x1x1xf32>
    %cst_10 = arith.constant dense<0.000000e+00> : vector<2x1xf32>
    %19 = vector.multi_reduction <add>, %1, %cst_10 [1] : vector<2x8x1xf32> to vector<2x1xf32>
    %20 = vector.shape_cast %19 : vector<2x1xf32> to vector<2x1x1xf32>
    %cst_11 = arith.constant 1.000000e+00 : f32
    %21 = vector.broadcast %cst_11 : f32 to vector<2x1x1xf32>
    %22 = arith.subf %20, %21 : vector<2x1x1xf32>
    %cst_12 = arith.constant 0.000000e+00 : f32
    %23 = vector.broadcast %cst_12 : f32 to vector<2x1x1xf32>
    %24 = arith.cmpf oeq, %22, %23 : vector<2x1x1xf32>
    %cst_13 = arith.constant 1.000000e+00 : f32
    %25 = vector.broadcast %cst_13 : f32 to vector<2x1x1xf32>
    %26 = arith.select %24, %25, %22 : vector<2x1x1xi1>, vector<2x1x1xf32>
    %27 = arith.divf %18, %26 : vector<2x1x1xf32>
    %28 = vector.broadcast %27 : vector<2x1x1xf32> to vector<2x8x1xf32>
    %29 = arith.divf %12, %28 : vector<2x8x1xf32>
    %c1_i32_14 = arith.constant 1 : i32
    %30 = tpu.dynamic_rotate %29 by %c1_i32_14 dim 1 : vector<2x8x1xf32>, i32 -> vector<2x8x1xf32>
    %c1_i32_15 = arith.constant 1 : i32
    %31 = vector.broadcast %c1_i32_15 : i32 to vector<2x8x1xi32>
    %32 = arith.cmpi sge, %2, %31 : vector<2x8x1xi32>
    %cst_16 = arith.constant 0.000000e+00 : f32
    %33 = vector.broadcast %cst_16 : f32 to vector<2x8x1xf32>
    %34 = arith.select %32, %30, %33 : vector<2x8x1xi1>, vector<2x8x1xf32>
    %35 = arith.addf %29, %34 : vector<2x8x1xf32>
    %c2_i32 = arith.constant 2 : i32
    %36 = tpu.dynamic_rotate %35 by %c2_i32 dim 1 : vector<2x8x1xf32>, i32 -> vector<2x8x1xf32>
    %c2_i32_17 = arith.constant 2 : i32
    %37 = vector.broadcast %c2_i32_17 : i32 to vector<2x8x1xi32>
    %38 = arith.cmpi sge, %2, %37 : vector<2x8x1xi32>
    %cst_18 = arith.constant 0.000000e+00 : f32
    %39 = vector.broadcast %cst_18 : f32 to vector<2x8x1xf32>
    %40 = arith.select %38, %36, %39 : vector<2x8x1xi1>, vector<2x8x1xf32>
    %41 = arith.addf %35, %40 : vector<2x8x1xf32>
    %c4_i32 = arith.constant 4 : i32
    %42 = tpu.dynamic_rotate %41 by %c4_i32 dim 1 : vector<2x8x1xf32>, i32 -> vector<2x8x1xf32>
    %c4_i32_19 = arith.constant 4 : i32
    %43 = vector.broadcast %c4_i32_19 : i32 to vector<2x8x1xi32>
    %44 = arith.cmpi sge, %2, %43 : vector<2x8x1xi32>
    %cst_20 = arith.constant 0.000000e+00 : f32
    %45 = vector.broadcast %cst_20 : f32 to vector<2x8x1xf32>
    %46 = arith.select %44, %42, %45 : vector<2x8x1xi1>, vector<2x8x1xf32>
    %47 = arith.addf %41, %46 : vector<2x8x1xf32>
    %48 = arith.sitofp %2 : vector<2x8x1xi32> to vector<2x8x1xf32>
    %49 = arith.addf %47, %48 : vector<2x8x1xf32>
    %cst_21 = arith.constant 1.000000e+00 : f32
    %50 = vector.broadcast %cst_21 : f32 to vector<2x8x1xf32>
    %51 = arith.addf %49, %50 : vector<2x8x1xf32>
    %cst_22 = arith.constant 0.000000e+00 : f32
    %52 = vector.broadcast %cst_22 : f32 to vector<2x8x1xf32>
    %53 = arith.cmpf oeq, %1, %52 : vector<2x8x1xf32>
    %cst_23 = arith.constant 0.000000e+00 : f32
    %54 = vector.broadcast %cst_23 : f32 to vector<2x8x1xf32>
    %55 = arith.select %53, %54, %51 : vector<2x8x1xi1>, vector<2x8x1xf32>
    %c0_24 = arith.constant 0 : index
    %c0_25 = arith.constant 0 : index
    %c0_26 = arith.constant 0 : index
    %56 = vector.load %arg4[%c0_24, %c0_25, %c0_26] : memref<1x1x32xf32, #tpu.memory_space<vmem>>, vector<1x1x32xf32>
    %57 = vector.broadcast %55 : vector<2x8x1xf32> to vector<2x8x32xf32>
    %58 = vector.broadcast %56 : vector<1x1x32xf32> to vector<2x8x32xf32>
    %59 = arith.mulf %57, %58 : vector<2x8x32xf32>
    %c0_27 = arith.constant 0 : index
    %c0_28 = arith.constant 0 : index
    %c0_29 = arith.constant 0 : index
    %60 = vector.load %arg5[%c0_27, %c0_28, %c0_29] : memref<1x1x32xf32, #tpu.memory_space<vmem>>, vector<1x1x32xf32>
    %61 = vector.broadcast %60 : vector<1x1x32xf32> to vector<2x8x32xf32>
    %62 = arith.addf %59, %61 : vector<2x8x32xf32>
    %c0_30 = arith.constant 0 : index
    %c0_31 = arith.constant 0 : index
    %c0_32 = arith.constant 0 : index
    %63 = vector.load %arg1[%c0_30, %c0_31, %c0_32] : memref<2x8x32xf32, #tpu.memory_space<vmem>>, vector<2x8x32xf32>
    %64 = math.sin %62 : vector<2x8x32xf32>
    %65 = arith.addf %63, %64 : vector<2x8x32xf32>
    %c0_33 = arith.constant 0 : index
    %c0_34 = arith.constant 0 : index
    %c0_35 = arith.constant 0 : index
    %66 = vector.load %arg6[%c0_33, %c0_34, %c0_35] : memref<2x8x32xf32, #tpu.memory_space<vmem>>, vector<2x8x32xf32>
    tpu.vector_store %arg6[%c0_33, %c0_34, %c0_35], %65 {strides = array<i32>} : memref<2x8x32xf32, #tpu.memory_space<vmem>>, vector<2x8x32xf32>,
    return
  }
  func.func @transform_0(%arg0: i32) -> (i32, i32, i32) {
    %c0_i32 = arith.constant 0 : i32
    %c0_i32_0 = arith.constant 0 : i32
    %c0_i32_1 = arith.constant 0 : i32
    return %arg0, %c0_i32, %c0_i32_0 : i32, i32, i32
  }
  func.func @transform_1(%arg0: i32) -> (i32, i32, i32) {
    %c0_i32 = arith.constant 0 : i32
    %c0_i32_0 = arith.constant 0 : i32
    %c0_i32_1 = arith.constant 0 : i32
    return %arg0, %c0_i32, %c0_i32_0 : i32, i32, i32
  }
  func.func @transform_2(%arg0: i32) -> (i32, i32, i32) {
    %c0_i32 = arith.constant 0 : i32
    %c0_i32_0 = arith.constant 0 : i32
    %c0_i32_1 = arith.constant 0 : i32
    return %arg0, %c0_i32, %c0_i32_0 : i32, i32, i32
  }
  func.func @transform_3(%arg0: i32) -> (i32, i32, i32) {
    %c0_i32 = arith.constant 0 : i32
    %c0_i32_0 = arith.constant 0 : i32
    %c0_i32_1 = arith.constant 0 : i32
    %c0_i32_2 = arith.constant 0 : i32
    return %c0_i32, %c0_i32_0, %c0_i32_1 : i32, i32, i32
  }
  func.func @transform_4(%arg0: i32) -> (i32, i32, i32) {
    %c0_i32 = arith.constant 0 : i32
    %c0_i32_0 = arith.constant 0 : i32
    %c0_i32_1 = arith.constant 0 : i32
    %c0_i32_2 = arith.constant 0 : i32
    return %c0_i32, %c0_i32_0, %c0_i32_1 : i32, i32, i32
  }
  func.func @transform_5(%arg0: i32) -> (i32, i32, i32) {
    %c0_i32 = arith.constant 0 : i32
    %c0_i32_0 = arith.constant 0 : i32
    %c0_i32_1 = arith.constant 0 : i32
    return %arg0, %c0_i32, %c0_i32_0 : i32, i32, i32
  }
}

</mosaic_0001>

<llo_original>
// kernel: tpu_custom_call.1
$region0: #{tpu_custom_call.1}
  #allocation0 [shape = 'u32[]', space=smem, size = 0x4, offset = 0x4, fixed_abs, tag = 'smem constant byte address 0x4 - core index']
  #allocation1 [shape = 'u32[144,128]{1,0:T(1,128)}', space=vmem, size = 0x12000, scoped, tag = 'internal scratch']
  %s0 = inlined_call_operand.vmem [shape: f32[2,8,32], index: 0, kind: input, shape index: {}]
  %s1 = inlined_call_operand.vmem [shape: f32[2,8,1], index: 1, kind: input, shape index: {}]
  %s2 = inlined_call_operand.vmem [shape: f32[2,8,1], index: 2, kind: input, shape index: {}]
  %s3 = inlined_call_operand.vmem [shape: f32[1,1,32], index: 3, kind: input, shape index: {}]
  %s4 = inlined_call_operand.vmem [shape: f32[1,1,32], index: 4, kind: input, shape index: {}]
  %s5 = inlined_call_operand.hbm [shape: f32[2,8,32], index: 5, kind: output, shape index: {}]
  %s6 = sld [smem:[#allocation0]]
  $region30: #{tpu_custom_call.1} parent=0
    _
  %s8 = ssub.s32 1, %s6
  %s9 = scalar_select 0, %s8, %s6
  $region1: #{tpu_custom_call.1} parent=0
    #allocation2 [shape = 'u8[8192]{0}', space=vmem, size = 0x2000, scoped, tag = 'output window, operand 0, single buffered']
    #allocation3 [shape = 's32[1]{0}', space=sflag, size = 0x4, scoped, tag = 'scoped memory for tpu_custom_call.1']
    %10 = vsyncpa [#allocation3], 0
    // Predicated region
    $region2: #{tpu_custom_call.1} parent=1 // pred_check
      _
    $region3: #{tpu_custom_call.1} parent=1 // pred_check_branch
      %12 = sbr.rel (0) target = $region5
    $region4: #{tpu_custom_call.1} parent=1 // pred_region
      _
    $region5: #{tpu_custom_call.1} parent=1 // pred_fallthru
      _
    // Predicated region
    $region6: #{tpu_custom_call.1} parent=1 // pred_check
      _
    $region7: #{tpu_custom_call.1} parent=1 // pred_check_branch
      %14 = sbr.rel (0) target = $region9
    $region8: #{tpu_custom_call.1} parent=1 // pred_region
      _
    $region9: #{tpu_custom_call.1} parent=1 // pred_fallthru
      _
    // Predicated region
    $region10: #{tpu_custom_call.1} parent=1 // pred_check
      _
    $region11: #{tpu_custom_call.1} parent=1 // pred_check_branch
      %16 = sbr.rel (0) target = $region13
    $region12: #{tpu_custom_call.1} parent=1 // pred_region
      _
    $region13: #{tpu_custom_call.1} parent=1 // pred_fallthru
      _
    // Predicated region
    $region14: #{tpu_custom_call.1} parent=1 // pred_check
      _
    $region15: #{tpu_custom_call.1} parent=1 // pred_check_branch
      %18 = sbr.rel (0) target = $region17
    $region16: #{tpu_custom_call.1} parent=1 // pred_region
      _
    $region17: #{tpu_custom_call.1} parent=1 // pred_fallthru
      _
    // Predicated region
    $region18: #{tpu_custom_call.1} parent=1 // pred_check
      _
    $region19: #{tpu_custom_call.1} parent=1 // pred_check_branch
      %20 = sbr.rel (0) target = $region21
    $region20: #{tpu_custom_call.1} parent=1 // pred_region
      _
    $region21: #{tpu_custom_call.1} parent=1 // pred_fallthru
      _
    %v21 = vld [vmem:[%s1] sm:$0xff]
    %v22 = vld [vmem:[%s1 + $0x8] sm:$0xff]
    %v23 = vld [vmem:[%s2] sm:$0xff]
    %v24 = vld [vmem:[%s2 + $0x8] sm:$0xff]
    %v25 = vlaneseq
    %v26 = vshrl.u32 %v25, 7
    %v27 = vrot.slane %v21, 7
    %v28 = vrot.slane %v22, 7
    %vm29 = vcmp.eq.s32.totalorder %v26, 0
    %v30 = vsub.f32 %v21, %v27
    %v31 = vsub.f32 %v22, %v28
    %v32 = vsel %vm29, 0.0, %v30
    %v33 = vsel %vm29, 0.0, %v31
    %vm34 = vcmp.eq.f32.partialorder %v23, 0.0
    %vm35 = vcmp.eq.f32.partialorder %v24, 0.0
    %v36 = vsel %vm34, 0.0, %v32
    %v37 = vsel %vm35, 0.0, %v33
    %vm38 = vcmask 7168
    %v39 = vsel %vm38, %v36, 0.0
    %v40 = vrot.slane %v39, 4
    %v41 = vadd.f32 %v39, %v40
    %v42 = vrot.slane %v41, 2
    %v43 = vadd.f32 %v41, %v42
    %v44 = vrot.slane %v43, 1
    %v45 = vadd.f32 %v43, %v44
    %v46 = vsel %vm38, %v37, 0.0
    %v47 = vrot.slane %v46, 4
    %v48 = vadd.f32 %v46, %v47
    %v49 = vrot.slane %v48, 2
    %v50 = vadd.f32 %v48, %v49
    %v51 = vrot.slane %v50, 1
    %v52 = vadd.f32 %v50, %v51
    %vm53 = vcmp.eq.f32.partialorder %v45, 0.0
    %vm54 = vcmp.eq.f32.partialorder %v52, 0.0
    %v55 = vsel %vm53, 1.0, %v45
    %v56 = vsel %vm54, 1.0, %v52
    %v57 = vsel %vm38, %v23, 0.0
    %v58 = vrot.slane %v57, 4
    %v59 = vadd.f32 %v57, %v58
    %v60 = vrot.slane %v59, 2
    %v61 = vadd.f32 %v59, %v60
    %v62 = vrot.slane %v61, 1
    %v63 = vadd.f32 %v61, %v62
    %v64 = vsel %vm38, %v24, 0.0
    %v65 = vrot.slane %v64, 4
    %v66 = vadd.f32 %v64, %v65
    %v67 = vrot.slane %v66, 2
    %v68 = vadd.f32 %v66, %v67
    %v69 = vrot.slane %v68, 1
    %v70 = vadd.f32 %v68, %v69
    %v71 = vsub.f32 %v63, 1.0
    %v72 = vsub.f32 %v70, 1.0
    %vm73 = vcmp.eq.f32.partialorder %v71, 0.0
    %vm74 = vcmp.eq.f32.partialorder %v72, 0.0
    %v75 = vsel %vm73, 1.0, %v71
    %v76 = vsel %vm74, 1.0, %v72
    %v77 = vrcp.pop %v75
    %v78 = vmul.f32 %v55, %v77
    %v79 = vrcp.pop %v76
    %v80 = vmul.f32 %v56, %v79
    %v81 = vrcp.pop %v78
    %v82 = vmul.f32 %v36, %v81
    %v83 = vrcp.pop %v80
    %v84 = vmul.f32 %v37, %v83
    %v85 = vrot.slane %v82, 7
    %v86 = vrot.slane %v84, 7
    %vm87 = vcmp.ge.s32.totalorder %v26, 1
    %v88 = vsel %vm87, %v85, 0.0
    %v89 = vsel %vm87, %v86, 0.0
    %v90 = vadd.f32 %v82, %v88
    %v91 = vadd.f32 %v84, %v89
    %v92 = vrot.slane %v90, 6
    %v93 = vrot.slane %v91, 6
    %vm94 = vcmp.ge.s32.totalorder %v26, 2
    %v95 = vsel %vm94, %v92, 0.0
    %v96 = vsel %vm94, %v93, 0.0
    %v97 = vadd.f32 %v90, %v95
    %v98 = vadd.f32 %v91, %v96
    %v99 = vrot.slane %v97, 4
    %v100 = vrot.slane %v98, 4
    %vm101 = vcmp.ge.s32.totalorder %v26, 4
    %v102 = vsel %vm101, %v99, 0.0
    %v103 = vsel %vm101, %v100, 0.0
    %v104 = vadd.f32 %v97, %v102
    %v105 = vadd.f32 %v98, %v103
    %v106 = vcvt.s32.f32 %v26
    %v107 = vadd.f32 %v104, %v106
    %v108 = vadd.f32 %v105, %v106
    %v109 = vadd.f32 %v107, 1.0
    %v110 = vadd.f32 %v108, 1.0
    %v111 = vsel %vm34, 0.0, %v109
    %v112 = vsel %vm35, 0.0, %v110
    %v113 = vld [vmem:[%s3] sm:$0x1]
    %115 = vset.pattern.permute.xlu0 0
    %116 = vperm.xlu0 %115, %v111
    %v117 = vpop.permute.xlu0 %116
    %120 = vset.pattern.permute.xlu0 0
    %121 = vperm.xlu0 %120, %v112
    %v122 = vpop.permute.xlu0 %121
    %v125 = vlaneseq
    %v126 = vshrl.u32 %v125, 7
    %v127 = vsub.s32 0, %v126
    %v128 = vrot.slane %v113, %v127
    %v130 = vmul.f32 %v117, %v128
    %v131 = vmul.f32 %v122, %v128
    %v132 = vld [vmem:[%s4] sm:$0x1]
    %v134 = vlaneseq
    %v135 = vshrl.u32 %v134, 7
    %v136 = vsub.s32 0, %v135
    %v137 = vrot.slane %v132, %v136
    %v139 = vadd.f32 %v130, %v137
    %v140 = vadd.f32 %v131, %v137
    %v141 = vld [vmem:[%s0] sm:$0xff]
    %v142 = vld [vmem:[%s0 + $0x8] sm:$0xff]
    %v143 = vand.u32 2147483647, %v139
    %vm144 = vcmp.le.f32.partialorder %v143, 0.7853982
    %vm145 = vcmp.lt.s32.totalorder %v139, 0
    %v146 = vand.u32 %v139, 2139095040
    %v147 = vshrl.u32 %v146, 23
    %v148 = vsub.s32 %v147, 127
    %v149 = vand.u32 2147483647, %v139
    %v150 = vand.u32 %v149, 8388607
    %v151 = vor.u32 %v150, 8388608
    %v152 = vsub.s32 0, %v151
    %v153 = vadd.s32 %v148, 1
    %vm154 = vcmp.gt.s32.totalorder %v153, 0
    %v155 = vsel %vm154, %v153, 0
    %v156 = vshrl.u32 %v155, 5
    %v157 = vand.u32 %v155, 31
    %v158 = vsub.s32 32, %v157
    %v159 = vshrl.u32 683565275, %v158
    %v160 = vshll.u32 683565275, %v157
    %v161 = vshrl.u32 2475754826, %v158
    %v162 = vor.u32 %v160, %v161
    %v163 = vshll.u32 2475754826, %v157
    %v164 = vshrl.u32 2131351028, %v158
    %v165 = vor.u32 %v163, %v164
    %v166 = vshll.u32 2131351028, %v157
    %v167 = vshrl.u32 2102212464, %v158
    %v168 = vor.u32 %v166, %v167
    %v169 = vshll.u32 2102212464, %v157
    %v170 = vshrl.u32 920167782, %v158
    %v171 = vor.u32 %v169, %v170
    %v172 = vshll.u32 920167782, %v157
    %v173 = vshrl.u32 1326507024, %v158
    %v174 = vor.u32 %v172, %v173
    %vm175 = vcmp.lt.s32.totalorder %v156, 1
    %vm176 = vcmp.lt.s32.totalorder %v156, 2
    %vm177 = vcmp.lt.s32.totalorder %v156, 3
    %vm178 = vcmp.lt.s32.totalorder %v156, 4
    %v179 = vsel %vm175, %v159, %v162
    %v180 = vsel %vm178, %v168, 2102212464
    %v181 = vsel %vm177, %v165, %v180
    %v182 = vsel %vm176, %v179, %v181
    %v183 = vsel %vm175, %v162, %v165
    %v184 = vsel %vm178, %v171, 920167782
    %v185 = vsel %vm177, %v168, %v184
    %v186 = vsel %vm176, %v183, %v185
    %v187 = vsel %vm175, %v165, %v168
    %v188 = vsel %vm178, %v174, 1326507024
    %v189 = vsel %vm177, %v171, %v188
    %v190 = vsel %vm176, %v187, %v189
    %v191 = vshll.u32 %v151, 8
    %v192 = vmul.u32.u64.compose %v191, %v190
    %v193 = vextract.low.u32 %v192
    %v194 = vextract.high.u32 %v192
    %v195 = vmul.u32.u64.compose %v191, %v186
    %v196 = vextract.low.u32 %v195
    %v197 = vextract.high.u32 %v195
    %v198 = vmul.u32 %v191, %v182
    %v199 = vadd.s32 %v194, %v196
    %vm200 = vc.u32 %v194, %v196
    %v201 = vadd.s32 %v197, 1
    %v202 = vsel %vm200, %v201, %v197
    %v203 = vadd.s32 %v198, %v202
    %v204 = vadd.s32 %v203, 536870912
    %v205 = vshrl.u32 %v204, 30
    %v206 = vshll.u32 %v205, 30
    %v207 = vsub.s32 %v203, %v206
    %vm208 = vcmp.lt.s32.totalorder %v207, 0
    %v209 = vsub.s32 0, %v207
    %v210 = vsel %vm208, %v209, %v207
    %v211 = vclz %v210
    %v212 = vsub.s32 %v211, 2
    %vm213 = vcmp.gt.s32.totalorder 0, %v212
    %v214 = vsel %vm213, 0, %v212
    %v215 = vsub.s32 32, %v214
    %v216 = vshll.u32 %v207, %v214
    %v217 = vshrl.u32 %v199, %v215
    %v218 = vor.u32 %v216, %v217
    %v219 = vsub.s32 4294967266, %v214
    %v220 = vadd.s32 %v219, 127
    %v221 = vshll.u32 %v220, 23
    %v222 = vor.u32 4788187, %v221
    %v223 = vand.u32 2147483647, %v222
    %v225 = vcvt.s32.f32 %v218
    %v226 = vmul.f32 %v225, %v223
    %v227 = vxor.u32 %v226, 2147483648
    %v228 = vsel %vm145, %v227, %v226
    %v229 = vsub.s32 4, %v205
    %v230 = vsel %vm145, %v229, %v205
    %v231 = vsel %vm144, %v139, %v228
    %v232 = vsel %vm144, 0, %v230
    %v233 = vcosq.f32.pop %v231
    %v234 = vsinq.f32.pop %v231
    %vm235 = vweird.f32 %v139
    %v236 = vadd.s32 %v232, 3
    %v237 = vand.u32 %v236, 3
    %vm238 = vcmp.lt.s32.totalorder %v237, 2
    %vm239 = vcmp.eq.s32.totalorder %v237, 0
    %v240 = vxor.u32 %v234, 2147483648
    %v241 = vsel %vm239, %v233, %v240
    %vm242 = vcmp.eq.s32.totalorder %v237, 2
    %v243 = vxor.u32 %v233, 2147483648
    %v244 = vsel %vm242, %v243, %v234
    %v245 = vsel %vm238, %v241, %v244
    %v246 = vsel %vm235, nan, %v245
    %v247 = vand.u32 2147483647, %v140
    %vm248 = vcmp.le.f32.partialorder %v247, 0.7853982
    %vm249 = vcmp.lt.s32.totalorder %v140, 0
    %v250 = vand.u32 %v140, 2139095040
    %v251 = vshrl.u32 %v250, 23
    %v252 = vsub.s32 %v251, 127
    %v253 = vand.u32 2147483647, %v140
    %v254 = vand.u32 %v253, 8388607
    %v255 = vor.u32 %v254, 8388608
    %v256 = vsub.s32 0, %v255
    %v257 = vadd.s32 %v252, 1
    %vm258 = vcmp.gt.s32.totalorder %v257, 0
    %v259 = vsel %vm258, %v257, 0
    %v260 = vshrl.u32 %v259, 5
    %v261 = vand.u32 %v259, 31
    %v262 = vsub.s32 32, %v261
    %v263 = vshrl.u32 683565275, %v262
    %v264 = vshll.u32 683565275, %v261
    %v265 = vshrl.u32 2475754826, %v262
    %v266 = vor.u32 %v264, %v265
    %v267 = vshll.u32 2475754826, %v261
    %v268 = vshrl.u32 2131351028, %v262
    %v269 = vor.u32 %v267, %v268
    %v270 = vshll.u32 2131351028, %v261
    %v271 = vshrl.u32 2102212464, %v262
    %v272 = vor.u32 %v270, %v271
    %v273 = vshll.u32 2102212464, %v261
    %v274 = vshrl.u32 920167782, %v262
    %v275 = vor.u32 %v273, %v274
    %v276 = vshll.u32 920167782, %v261
    %v277 = vshrl.u32 1326507024, %v262
    %v278 = vor.u32 %v276, %v277
    %vm279 = vcmp.lt.s32.totalorder %v260, 1
    %vm280 = vcmp.lt.s32.totalorder %v260, 2
    %vm281 = vcmp.lt.s32.totalorder %v260, 3
    %vm282 = vcmp.lt.s32.totalorder %v260, 4
    %v283 = vsel %vm279, %v263, %v266
    %v284 = vsel %vm282, %v272, 2102212464
    %v285 = vsel %vm281, %v269, %v284
    %v286 = vsel %vm280, %v283, %v285
    %v287 = vsel %vm279, %v266, %v269
    %v288 = vsel %vm282, %v275, 920167782
    %v289 = vsel %vm281, %v272, %v288
    %v290 = vsel %vm280, %v287, %v289
    %v291 = vsel %vm279, %v269, %v272
    %v292 = vsel %vm282, %v278, 1326507024
    %v293 = vsel %vm281, %v275, %v292
    %v294 = vsel %vm280, %v291, %v293
    %v295 = vshll.u32 %v255, 8
    %v296 = vmul.u32.u64.compose %v295, %v294
    %v297 = vextract.low.u32 %v296
    %v298 = vextract.high.u32 %v296
    %v299 = vmul.u32.u64.compose %v295, %v290
    %v300 = vextract.low.u32 %v299
    %v301 = vextract.high.u32 %v299
    %v302 = vmul.u32 %v295, %v286
    %v303 = vadd.s32 %v298, %v300
    %vm304 = vc.u32 %v298, %v300
    %v305 = vadd.s32 %v301, 1
    %v306 = vsel %vm304, %v305, %v301
    %v307 = vadd.s32 %v302, %v306
    %v308 = vadd.s32 %v307, 536870912
    %v309 = vshrl.u32 %v308, 30
    %v310 = vshll.u32 %v309, 30
    %v311 = vsub.s32 %v307, %v310
    %vm312 = vcmp.lt.s32.totalorder %v311, 0
    %v313 = vsub.s32 0, %v311
    %v314 = vsel %vm312, %v313, %v311
    %v315 = vclz %v314
    %v316 = vsub.s32 %v315, 2
    %vm317 = vcmp.gt.s32.totalorder 0, %v316
    %v318 = vsel %vm317, 0, %v316
    %v319 = vsub.s32 32, %v318
    %v320 = vshll.u32 %v311, %v318
    %v321 = vshrl.u32 %v303, %v319
    %v322 = vor.u32 %v320, %v321
    %v323 = vsub.s32 4294967266, %v318
    %v324 = vadd.s32 %v323, 127
    %v325 = vshll.u32 %v324, 23
    %v326 = vor.u32 4788187, %v325
    %v327 = vand.u32 2147483647, %v326
    %v329 = vcvt.s32.f32 %v322
    %v330 = vmul.f32 %v329, %v327
    %v331 = vxor.u32 %v330, 2147483648
    %v332 = vsel %vm249, %v331, %v330
    %v333 = vsub.s32 4, %v309
    %v334 = vsel %vm249, %v333, %v309
    %v335 = vsel %vm248, %v140, %v332
    %v336 = vsel %vm248, 0, %v334
    %v337 = vcosq.f32.pop %v335
    %v338 = vsinq.f32.pop %v335
    %vm339 = vweird.f32 %v140
    %v340 = vadd.s32 %v336, 3
    %v341 = vand.u32 %v340, 3
    %vm342 = vcmp.lt.s32.totalorder %v341, 2
    %vm343 = vcmp.eq.s32.totalorder %v341, 0
    %v344 = vxor.u32 %v338, 2147483648
    %v345 = vsel %vm343, %v337, %v344
    %vm346 = vcmp.eq.s32.totalorder %v341, 2
    %v347 = vxor.u32 %v337, 2147483648
    %v348 = vsel %vm346, %v347, %v338
    %v349 = vsel %vm342, %v345, %v348
    %v350 = vsel %vm339, nan, %v349
    %v351 = vadd.f32 %v141, %v246
    %v352 = vadd.f32 %v142, %v350
    %vm353 = vcmask 261120
    %354 = vst.msk [vmem:[#allocation2] sm:$0xff] %vm353, %v351
    %355 = vst.msk [vmem:[#allocation2 + $0x8] sm:$0xff] %vm353, %v352
    // Predicated region
    $region22: #{tpu_custom_call.1} parent=1 // pred_check
      _
    $region23: #{tpu_custom_call.1} parent=1 // pred_check_branch
      %357 = sbr.rel (0) target = $region25
    $region24: #{tpu_custom_call.1} parent=1 // pred_region
      %s359 = ssub.s32 256, 256
      %360 = vsyncadd [#allocation3], %s359
      %s361 = sshll.u32 [#allocation2], 4
      %s362 = int_to_ptr.vmem [resolvable:$true] %s361
      %367 = dma.vmem_to_hbm [thread:$0]  %s362, 256, %s5, [#allocation3], 128, 128, 8
    $region25: #{tpu_custom_call.1} parent=1 // pred_fallthru
      _
    // Predicated region
    $region26: #{tpu_custom_call.1} parent=1 // pred_check
      _
    $region27: #{tpu_custom_call.1} parent=1 // pred_check_branch
      %369 = sbr.rel (0) target = $region29
    $region28: #{tpu_custom_call.1} parent=1 // pred_region
      %370 = dma.done [#allocation3], 256
    $region29: #{tpu_custom_call.1} parent=1 // pred_fallthru
      _
    %371 = vsyncpa [#allocation3], 1

</llo_original>
